<compile_context>
chip_gen: v7x
topology: tpu7x:2x2x1
jax: 0.10.0
libtpu: 0.0.40
codegen_flags: <defaults>
</compile_context>

<pallas_src>
import functools

import jax
import jax.numpy as jnp
from jax import lax
from jax.experimental import pallas as pl
from jax.experimental.pallas import tpu as pltpu

# ---- deterministic "config" ---------------------------------------------
VOLTAGE_DECAY = 0.2
BETA = 1.0 - VOLTAGE_DECAY           # self.beta
THRESHOLD_BASE = 1.0                 # self.threshold_base
RESTING_VOLTAGE = 0.0                # self.resting_voltage
THETA_PLUS = 0.05                    # self.theta_plus
THETA_DECAY = 0.9                    # self.theta_decay

# murmur3 fmix32 constants, expressed as signed int32 (same bit patterns).
_FMIX_C1 = -2048144789   # 0x85EBCA6B
_FMIX_C2 = -1028477387   # 0xC2B2AE35
_GOLDEN = -1640531527    # 0x9E3779B9


def _mix32(x):
    """murmur3 finalizer on int32 lanes (wrapping mults, logical shifts)."""
    x = x ^ lax.shift_right_logical(x, 16)
    x = x * jnp.int32(_FMIX_C1)
    x = x ^ lax.shift_right_logical(x, 13)
    x = x * jnp.int32(_FMIX_C2)
    x = x ^ lax.shift_right_logical(x, 16)
    return x


def _lif_kernel(n_cols_total, seed_ref, x_ref, mem_ref, theta_ref,
                spk_ref, mem_out_ref, theta_out_ref):
    x = x_ref[...]
    mem = mem_ref[...]
    theta = theta_ref[...]

    # mem = beta * (mem - V_rest) + V_rest + input
    mem = BETA * (mem - RESTING_VOLTAGE) + RESTING_VOLTAGE + x

    # threshold = threshold_base + theta ; prob_spk = sigmoid(mem - threshold)
    prob_spk = jax.nn.sigmoid(mem - (THRESHOLD_BASE + theta))

    # --- spk = bernoulli(prob_spk) via a stateless counter-based hash RNG ---
    # (portable replacement for the TPU hardware PRNG; deterministic given
    #  the host seed, independent of tiling / core assignment)
    br, bc = x.shape
    rows = lax.broadcasted_iota(jnp.int32, (br, bc), 0) + pl.program_id(0) * br
    cols = lax.broadcasted_iota(jnp.int32, (br, bc), 1) + pl.program_id(1) * bc
    gidx = rows * jnp.int32(n_cols_total) + cols       # unique global element id
    seed = seed_ref[0]
    h = _mix32(gidx ^ (seed * jnp.int32(_GOLDEN)))
    h = _mix32(h ^ seed)
    # low 24 bits of the hash -> exact f32 uniform in [0, 1)
    u = lax.shift_right_logical(h, 8).astype(jnp.float32) * (1.0 / (1 << 24))
    spk = (u < prob_spk).astype(x.dtype)

    # mem = mem * (1 - spk)   (hard reset on spike)
    mem_out_ref[...] = mem * (1.0 - spk)
    # theta = theta_decay * theta + theta_plus * spk
    theta_out_ref[...] = THETA_DECAY * theta + THETA_PLUS * spk
    spk_ref[...] = spk


def _pick_block_dim(dim, quantum, cap):
    """Largest multiple of `quantum` that divides `dim` and is <= cap.

    Falls back to the full dim when it is not a multiple of `quantum`
    (block_shape == array dim is always legal).
    """
    if dim % quantum != 0:
        return dim
    k = dim // quantum
    best = 1
    for d in range(1, k + 1):
        if k % d == 0 and d * quantum <= cap:
            best = d
    return best * quantum


def stochastic_adaptive_lif(input_, mem, theta, seed, *, target_block_bytes=1 << 20):
    """Pallas implementation of StochasticAdaptiveLIF.forward.

    input_, mem, theta: (B, N) float32.
    seed: int32 array of shape (1,) (scalar-prefetched into SMEM).
    Returns (spk, mem, theta), all (B, N) float32.
    """
    B, N = input_.shape
    itemsize = input_.dtype.itemsize

    # Lane axis: as wide as possible (lane-dense, unmasked vst), capped at 4096.
    block_cols = _pick_block_dim(N, 128, cap=min(N, 4096))
    # Sublane axis: fill a ~1 MiB per-array tile budget. 6 arrays x 2 buffers
    # x 1 MiB ~= 12 MiB, safe for v5e/v6e/v7x scoped VMEM.
    max_rows = max(8, target_block_bytes // (block_cols * itemsize))
    block_rows = _pick_block_dim(B, 8, cap=min(B, max_rows))

    grid = (B // block_rows, N // block_cols)

    tile = pl.BlockSpec((block_rows, block_cols), lambda i, j, seed_ref: (i, j))
    out_sds = jax.ShapeDtypeStruct((B, N), input_.dtype)

    kernel = functools.partial(_lif_kernel, N)

    return pl.pallas_call(
        kernel,
        out_shape=(out_sds, out_sds, out_sds),
        grid_spec=pltpu.PrefetchScalarGridSpec(
            num_scalar_prefetch=1,
            grid=grid,
            in_specs=(tile, tile, tile),
            out_specs=(tile, tile, tile),
        ),
        # Recurrent state is overwritten every step: alias mem->mem_out and
        # theta->theta_out (operand indices include the scalar-prefetch seed).
        input_output_aliases={2: 1, 3: 2},
        compiler_params=pltpu.CompilerParams(
            # Stateless per-element RNG -> no ordering dependence; lets v7x
            # shard the grid across both TensorCores. Neutral on v5e/v6e.
            dimension_semantics=("parallel", "parallel"),
            vmem_limit_bytes=32 * 1024 * 1024,
        ),
    )(seed, input_, mem, theta)


if __name__ == "__main__":
    # Small, module-consistent shapes: batch=16 "neuron rows", hidden=128 neurons.
    B, N = 16, 128
    key = jax.random.PRNGKey(0)
    k1, k2, k3 = jax.random.split(key, 3)

    input_ = jax.random.normal(k1, (B, N), dtype=jnp.float32)
    mem = jax.random.normal(k2, (B, N), dtype=jnp.float32) * 0.5
    theta = jax.random.uniform(k3, (B, N), dtype=jnp.float32) * 0.1
    seed = jnp.array([42], dtype=jnp.int32)

    spk, mem_out, theta_out = stochastic_adaptive_lif(input_, mem, theta, seed)
    jax.block_until_ready((spk, mem_out, theta_out))

    # Deterministic parts of the update must match the reference exactly.
    mem_pre = BETA * (mem - RESTING_VOLTAGE) + RESTING_VOLTAGE + input_
    assert spk.shape == (B, N) and mem_out.shape == (B, N) and theta_out.shape == (B, N)
    assert bool(jnp.all((spk == 0.0) | (spk == 1.0)))
    assert bool(jnp.allclose(mem_out, mem_pre * (1.0 - spk), atol=1e-5))
    assert bool(jnp.allclose(theta_out, THETA_DECAY * theta + THETA_PLUS * spk, atol=1e-5))

    print("KERNEL_OK")
</pallas_src>

<mosaic_0001>
module attributes {stable_mosaic.version = 11 : i64} {
  func.func @_lif_kernel(%arg0: i32, %arg1: i32, %arg2: memref<1xi32, #tpu.memory_space<smem>>, %arg3: memref<16x128xf32, #tpu.memory_space<vmem>>, %arg4: memref<16x128xf32, #tpu.memory_space<vmem>>, %arg5: memref<16x128xf32, #tpu.memory_space<vmem>>, %arg6: memref<16x128xf32, #tpu.memory_space<vmem>>, %arg7: memref<16x128xf32, #tpu.memory_space<vmem>>, %arg8: memref<16x128xf32, #tpu.memory_space<vmem>>) attributes {dimension_semantics = [#tpu.dimension_semantics<parallel>, #tpu.dimension_semantics<parallel>], iteration_bounds = array<i64: 1, 1>, scalar_prefetch = 1 : i64, scratch_operands = 0 : i64, tpu.core_type = #tpu.core_type<tc>, window_params = [{transform_indices = @transform_0, window_bounds = array<i64: 16, 128>}, {transform_indices = @transform_1, window_bounds = array<i64: 16, 128>}, {transform_indices = @transform_2, window_bounds = array<i64: 16, 128>}, {transform_indices = @transform_3, window_bounds = array<i64: 16, 128>}, {transform_indices = @transform_4, window_bounds = array<i64: 16, 128>}, {transform_indices = @transform_5, window_bounds = array<i64: 16, 128>}]} {
    %c0 = arith.constant 0 : index
    %c0_0 = arith.constant 0 : index
    %0 = vector.load %arg3[%c0, %c0_0] : memref<16x128xf32, #tpu.memory_space<vmem>>, vector<16x128xf32>
    %c0_1 = arith.constant 0 : index
    %c0_2 = arith.constant 0 : index
    %1 = vector.load %arg4[%c0_1, %c0_2] : memref<16x128xf32, #tpu.memory_space<vmem>>, vector<16x128xf32>
    %c0_3 = arith.constant 0 : index
    %c0_4 = arith.constant 0 : index
    %2 = vector.load %arg5[%c0_3, %c0_4] : memref<16x128xf32, #tpu.memory_space<vmem>>, vector<16x128xf32>
    %cst = arith.constant 0.000000e+00 : f32
    %3 = vector.broadcast %cst : f32 to vector<16x128xf32>
    %4 = arith.subf %1, %3 : vector<16x128xf32>
    %cst_5 = arith.constant 8.000000e-01 : f32
    %5 = vector.broadcast %cst_5 : f32 to vector<16x128xf32>
    %6 = arith.mulf %5, %4 : vector<16x128xf32>
    %cst_6 = arith.constant 0.000000e+00 : f32
    %7 = vector.broadcast %cst_6 : f32 to vector<16x128xf32>
    %8 = arith.addf %6, %7 : vector<16x128xf32>
    %9 = arith.addf %8, %0 : vector<16x128xf32>
    %cst_7 = arith.constant 1.000000e+00 : f32
    %10 = vector.broadcast %cst_7 : f32 to vector<16x128xf32>
    %11 = arith.addf %10, %2 : vector<16x128xf32>
    %12 = arith.subf %9, %11 : vector<16x128xf32>
    %13 = arith.negf %12 : vector<16x128xf32>
    %14 = math.exp %13 : vector<16x128xf32>
    %cst_8 = arith.constant 1.000000e+00 : f32
    %15 = vector.broadcast %cst_8 : f32 to vector<16x128xf32>
    %16 = arith.addf %15, %14 : vector<16x128xf32>
    %17 = arith.divf %15, %16 : vector<16x128xf32>
    %18 = tpu.iota {dimensions = array<i32: 0>} : vector<16x128xi32>
    %c16_i32 = arith.constant 16 : i32
    %19 = arith.muli %arg0, %c16_i32 : i32
    %20 = vector.broadcast %19 : i32 to vector<16x128xi32>
    %21 = arith.addi %18, %20 : vector<16x128xi32>
    %22 = tpu.iota {dimensions = array<i32: 1>} : vector<16x128xi32>
    %c128_i32 = arith.constant 128 : i32
    %23 = arith.muli %arg1, %c128_i32 : i32
    %24 = vector.broadcast %23 : i32 to vector<16x128xi32>
    %25 = arith.addi %22, %24 : vector<16x128xi32>
    %c128_i32_9 = arith.constant 128 : i32
    %26 = vector.broadcast %c128_i32_9 : i32 to vector<16x128xi32>
    %27 = arith.muli %21, %26 : vector<16x128xi32>
    %28 = arith.addi %27, %25 : vector<16x128xi32>
    %c0_10 = arith.constant 0 : index
    %29 = memref.load %arg2[%c0_10] : memref<1xi32, #tpu.memory_space<smem>>
    %c-1640531527_i32 = arith.constant -1640531527 : i32
    %30 = arith.muli %29, %c-1640531527_i32 : i32
    %31 = vector.broadcast %30 : i32 to vector<16x128xi32>
    %32 = arith.xori %28, %31 : vector<16x128xi32>
    %c16_i32_11 = arith.constant 16 : i32
    %33 = vector.broadcast %c16_i32_11 : i32 to vector<16x128xi32>
    %34 = arith.shrui %32, %33 : vector<16x128xi32>
    %35 = arith.xori %32, %34 : vector<16x128xi32>
    %c-2048144789_i32 = arith.constant -2048144789 : i32
    %36 = vector.broadcast %c-2048144789_i32 : i32 to vector<16x128xi32>
    %37 = arith.muli %35, %36 : vector<16x128xi32>
    %c13_i32 = arith.constant 13 : i32
    %38 = vector.broadcast %c13_i32 : i32 to vector<16x128xi32>
    %39 = arith.shrui %37, %38 : vector<16x128xi32>
    %40 = arith.xori %37, %39 : vector<16x128xi32>
    %c-1028477387_i32 = arith.constant -1028477387 : i32
    %41 = vector.broadcast %c-1028477387_i32 : i32 to vector<16x128xi32>
    %42 = arith.muli %40, %41 : vector<16x128xi32>
    %c16_i32_12 = arith.constant 16 : i32
    %43 = vector.broadcast %c16_i32_12 : i32 to vector<16x128xi32>
    %44 = arith.shrui %42, %43 : vector<16x128xi32>
    %45 = arith.xori %42, %44 : vector<16x128xi32>
    %46 = vector.broadcast %29 : i32 to vector<16x128xi32>
    %47 = arith.xori %45, %46 : vector<16x128xi32>
    %c16_i32_13 = arith.constant 16 : i32
    %48 = vector.broadcast %c16_i32_13 : i32 to vector<16x128xi32>
    %49 = arith.shrui %47, %48 : vector<16x128xi32>
    %50 = arith.xori %47, %49 : vector<16x128xi32>
    %c-2048144789_i32_14 = arith.constant -2048144789 : i32
    %51 = vector.broadcast %c-2048144789_i32_14 : i32 to vector<16x128xi32>
    %52 = arith.muli %50, %51 : vector<16x128xi32>
    %c13_i32_15 = arith.constant 13 : i32
    %53 = vector.broadcast %c13_i32_15 : i32 to vector<16x128xi32>
    %54 = arith.shrui %52, %53 : vector<16x128xi32>
    %55 = arith.xori %52, %54 : vector<16x128xi32>
    %c-1028477387_i32_16 = arith.constant -1028477387 : i32
    %56 = vector.broadcast %c-1028477387_i32_16 : i32 to vector<16x128xi32>
    %57 = arith.muli %55, %56 : vector<16x128xi32>
    %c16_i32_17 = arith.constant 16 : i32
    %58 = vector.broadcast %c16_i32_17 : i32 to vector<16x128xi32>
    %59 = arith.shrui %57, %58 : vector<16x128xi32>
    %60 = arith.xori %57, %59 : vector<16x128xi32>
    %c8_i32 = arith.constant 8 : i32
    %61 = vector.broadcast %c8_i32 : i32 to vector<16x128xi32>
    %62 = arith.shrui %60, %61 : vector<16x128xi32>
    %63 = arith.sitofp %62 : vector<16x128xi32> to vector<16x128xf32>
    %cst_18 = arith.constant 5.96046448E-8 : f32
    %64 = vector.broadcast %cst_18 : f32 to vector<16x128xf32>
    %65 = arith.mulf %63, %64 : vector<16x128xf32>
    %66 = arith.cmpf olt, %65, %17 : vector<16x128xf32>
    %67 = arith.extui %66 : vector<16x128xi1> to vector<16x128xi32>
    %68 = arith.sitofp %67 : vector<16x128xi32> to vector<16x128xf32>
    %cst_19 = arith.constant 1.000000e+00 : f32
    %69 = vector.broadcast %cst_19 : f32 to vector<16x128xf32>
    %70 = arith.subf %69, %68 : vector<16x128xf32>
    %71 = arith.mulf %9, %70 : vector<16x128xf32>
    %c0_20 = arith.constant 0 : index
    %c0_21 = arith.constant 0 : index
    %72 = vector.load %arg7[%c0_20, %c0_21] : memref<16x128xf32, #tpu.memory_space<vmem>>, vector<16x128xf32>
    tpu.vector_store %arg7[%c0_20, %c0_21], %71 {strides = array<i32>} : memref<16x128xf32, #tpu.memory_space<vmem>>, vector<16x128xf32>,
    %cst_22 = arith.constant 0.899999976 : f32
    %73 = vector.broadcast %cst_22 : f32 to vector<16x128xf32>
    %74 = arith.mulf %73, %2 : vector<16x128xf32>
    %cst_23 = arith.constant 5.000000e-02 : f32
    %75 = vector.broadcast %cst_23 : f32 to vector<16x128xf32>
    %76 = arith.mulf %75, %68 : vector<16x128xf32>
    %77 = arith.addf %74, %76 : vector<16x128xf32>
    %c0_24 = arith.constant 0 : index
    %c0_25 = arith.constant 0 : index
    %78 = vector.load %arg8[%c0_24, %c0_25] : memref<16x128xf32, #tpu.memory_space<vmem>>, vector<16x128xf32>
    tpu.vector_store %arg8[%c0_24, %c0_25], %77 {strides = array<i32>} : memref<16x128xf32, #tpu.memory_space<vmem>>, vector<16x128xf32>,
    %c0_26 = arith.constant 0 : index
    %c0_27 = arith.constant 0 : index
    %79 = vector.load %arg6[%c0_26, %c0_27] : memref<16x128xf32, #tpu.memory_space<vmem>>, vector<16x128xf32>
    tpu.vector_store %arg6[%c0_26, %c0_27], %68 {strides = array<i32>} : memref<16x128xf32, #tpu.memory_space<vmem>>, vector<16x128xf32>,
    return
  }
  func.func @transform_0(%arg0: i32, %arg1: i32, %arg2: memref<1xi32, #tpu.memory_space<smem>>) -> (i32, i32) {
    %c0_i32 = arith.constant 0 : i32
    return %arg0, %arg1 : i32, i32
  }
  func.func @transform_1(%arg0: i32, %arg1: i32, %arg2: memref<1xi32, #tpu.memory_space<smem>>) -> (i32, i32) {
    %c0_i32 = arith.constant 0 : i32
    return %arg0, %arg1 : i32, i32
  }
  func.func @transform_2(%arg0: i32, %arg1: i32, %arg2: memref<1xi32, #tpu.memory_space<smem>>) -> (i32, i32) {
    %c0_i32 = arith.constant 0 : i32
    return %arg0, %arg1 : i32, i32
  }
  func.func @transform_3(%arg0: i32, %arg1: i32, %arg2: memref<1xi32, #tpu.memory_space<smem>>) -> (i32, i32) {
    %c0_i32 = arith.constant 0 : i32
    return %arg0, %arg1 : i32, i32
  }
  func.func @transform_4(%arg0: i32, %arg1: i32, %arg2: memref<1xi32, #tpu.memory_space<smem>>) -> (i32, i32) {
    %c0_i32 = arith.constant 0 : i32
    return %arg0, %arg1 : i32, i32
  }
  func.func @transform_5(%arg0: i32, %arg1: i32, %arg2: memref<1xi32, #tpu.memory_space<smem>>) -> (i32, i32) {
    %c0_i32 = arith.constant 0 : i32
    return %arg0, %arg1 : i32, i32
  }
}

</mosaic_0001>

<llo_original>
// kernel: tpu_custom_call.1
$region0: #{tpu_custom_call.1}
  #allocation0 [shape = 'u32[]', space=smem, size = 0x4, offset = 0x4, fixed_abs, tag = 'smem constant byte address 0x4 - core index']
  #allocation1 [shape = 'u32[144,128]{1,0:T(1,128)}', space=vmem, size = 0x12000, scoped, tag = 'internal scratch']
  #allocation2 [shape = 's32[1]{0}', space=sflag, size = 0x4, scoped, tag = 'scoped memory for tpu_custom_call.1']
  #allocation3 [shape = 's32[1]{0:T(128)S(6)}', space=smem, size = 0x200, scoped, tag = 'prefetched SMEM operand 0']
  %s0 = inlined_call_operand.<no memory space> [shape: s32[1], index: 0, kind: input, shape index: {}]
  %s1 = inlined_call_operand.vmem [shape: f32[16,128], index: 1, kind: input, shape index: {}]
  %s2 = inlined_call_operand.hbm [shape: f32[16,128], index: 2, kind: input, shape index: {}, may-alias: {2,5}]
  %s3 = inlined_call_operand.hbm [shape: f32[16,128], index: 3, kind: input, shape index: {}, may-alias: {3,6}]
  %s4 = inlined_call_operand.hbm [shape: f32[16,128], index: 4, kind: output, shape index: {0}]
  %s5 = inlined_call_operand.hbm [shape: f32[16,128], index: 5, kind: output, shape index: {1}, may-alias: {2,5}]
  %s6 = inlined_call_operand.hbm [shape: f32[16,128], index: 6, kind: output, shape index: {2}, may-alias: {3,6}]
  %7 = xla_tuple %s4, %s5, %s6
  %s8 = sld [smem:[#allocation0]]
  $region46: #{tpu_custom_call.1} parent=0
    _
  %s10 = ssub.s32 1, %s8
  %s11 = scalar_select 0, %s10, %s8
  %12 = sst [smem:[#allocation3]] %s0
  $region1: #{tpu_custom_call.1} parent=0
    #allocation4 [shape = 'u8[8192]{0}', space=vmem, size = 0x2000, scoped, tag = 'input window, operand 2, single buffered']
    #allocation5 [shape = 's32[1]{0}', space=sflag, size = 0x4, scoped, tag = 'scoped memory for tpu_custom_call.1']
    #allocation6 [shape = 's32[1]{0}', space=sflag, size = 0x4, scoped, tag = 'scoped memory for tpu_custom_call.1']
    #allocation7 [shape = 'u8[8192]{0}', space=vmem, size = 0x2000, scoped, tag = 'input window, operand 3, single buffered']
    #allocation8 [shape = 's32[1]{0}', space=sflag, size = 0x4, scoped, tag = 'scoped memory for tpu_custom_call.1']
    #allocation9 [shape = 'u8[8192]{0}', space=vmem, size = 0x2000, scoped, tag = 'output window, operand 0, single buffered']
    #allocation10 [shape = 'u8[8192]{0}', space=vmem, size = 0x2000, scoped, tag = 'output window, operand 1, single buffered']
    #allocation11 [shape = 's32[1]{0}', space=sflag, size = 0x4, scoped, tag = 'scoped memory for tpu_custom_call.1']
    #allocation12 [shape = 'u8[8192]{0}', space=vmem, size = 0x2000, scoped, tag = 'output window, operand 2, single buffered']
    %13 = vsyncpa [#allocation5], 0
    %14 = vsyncpa [#allocation8], 0
    %15 = vsyncpa [#allocation6], 0
    %16 = vsyncpa [#allocation11], 0
    // Predicated region
    $region2: #{tpu_custom_call.1} parent=1 // pred_check
      _
    $region3: #{tpu_custom_call.1} parent=1 // pred_check_branch
      %18 = sbr.rel (0) target = $region5
    $region4: #{tpu_custom_call.1} parent=1 // pred_region
      _
    $region5: #{tpu_custom_call.1} parent=1 // pred_fallthru
      _
    // Predicated region
    $region6: #{tpu_custom_call.1} parent=1 // pred_check
      _
    $region7: #{tpu_custom_call.1} parent=1 // pred_check_branch
      %20 = sbr.rel (0) target = $region9
    $region8: #{tpu_custom_call.1} parent=1 // pred_region
      %s22 = ssub.s32 256, 256
      %23 = vsyncadd [#allocation5], %s22
      %s24 = sshll.u32 [#allocation4], 4
      %s25 = int_to_ptr.vmem [resolvable:$true] %s24
      %30 = dma.hbm_to_vmem [thread:$0]  %s2, 256, %s25, [#allocation5], 128, 128, 8
    $region9: #{tpu_custom_call.1} parent=1 // pred_fallthru
      _
    // Predicated region
    $region10: #{tpu_custom_call.1} parent=1 // pred_check
      _
    $region11: #{tpu_custom_call.1} parent=1 // pred_check_branch
      %32 = sbr.rel (0) target = $region13
    $region12: #{tpu_custom_call.1} parent=1 // pred_region
      %s34 = ssub.s32 256, 256
      %35 = vsyncadd [#allocation8], %s34
      %s36 = sshll.u32 [#allocation7], 4
      %s37 = int_to_ptr.vmem [resolvable:$true] %s36
      %42 = dma.hbm_to_vmem [thread:$0]  %s3, 256, %s37, [#allocation8], 128, 128, 8
    $region13: #{tpu_custom_call.1} parent=1 // pred_fallthru
      _
    // Predicated region
    $region14: #{tpu_custom_call.1} parent=1 // pred_check
      _
    $region15: #{tpu_custom_call.1} parent=1 // pred_check_branch
      %44 = sbr.rel (0) target = $region17
    $region16: #{tpu_custom_call.1} parent=1 // pred_region
      %45 = dma.done [#allocation5], 256
    $region17: #{tpu_custom_call.1} parent=1 // pred_fallthru
      _
    // Predicated region
    $region18: #{tpu_custom_call.1} parent=1 // pred_check
      _
    $region19: #{tpu_custom_call.1} parent=1 // pred_check_branch
      %47 = sbr.rel (0) target = $region21
    $region20: #{tpu_custom_call.1} parent=1 // pred_region
      %48 = dma.done [#allocation8], 256
    $region21: #{tpu_custom_call.1} parent=1 // pred_fallthru
      _
    %v49 = vld [vmem:[%s1] sm:$0xff]
    %v50 = vld [vmem:[%s1 + $0x8] sm:$0xff]
    %v51 = vld [vmem:[#allocation4] sm:$0xff]
    %v52 = vld [vmem:[#allocation4 + $0x8] sm:$0xff]
    %v53 = vld [vmem:[#allocation7] sm:$0xff]
    %v54 = vld [vmem:[#allocation7 + $0x8] sm:$0xff]
    %v55 = vmul.f32 %v51, 0.8
    %v56 = vmul.f32 %v52, 0.8
    %v57 = vadd.f32 %v55, 0.0
    %v58 = vadd.f32 %v56, 0.0
    %v59 = vadd.f32 %v57, %v49
    %v60 = vadd.f32 %v58, %v50
    %v61 = vadd.f32 %v53, 1.0
    %v62 = vadd.f32 %v54, 1.0
    %v63 = vsub.f32 %v59, %v61
    %v64 = vsub.f32 %v60, %v62
    %v65 = vxor.u32 %v63, 2147483648
    %v66 = vxor.u32 %v64, 2147483648
    %v67 = vmul.f32 %v65, 1.442695
    %v68 = vpow.pop %v67
    %v69 = vmul.f32 %v66, 1.442695
    %v70 = vpow.pop %v69
    %v71 = vadd.f32 %v68, 1.0
    %v72 = vadd.f32 %v70, 1.0
    %v73 = vrcp.pop %v71
    %v74 = vmul.f32 1.0, %v73
    %v75 = vrcp.pop %v72
    %v76 = vmul.f32 1.0, %v75
    %v77 = vlaneseq
    %v78 = vshrl.u32 %v77, 7
    %v79 = vadd.s32 %v78, 8
    %s80 = smul.u32 0, 16
    %v81 = vstv %s80
    %v82 = vadd.s32 %v78, %v81
    %v83 = vadd.s32 %v79, %v81
    %v84 = vlaneseq
    %v85 = vand.u32 %v84, 127
    %s86 = smul.u32 0, 128
    %v87 = vstv %s86
    %v88 = vadd.s32 %v85, %v87
    %v89 = vmul.u32 %v82, 128
    %v90 = vmul.u32 %v83, 128
    %v91 = vadd.s32 %v89, %v88
    %v92 = vadd.s32 %v90, %v88
    %s93 = sld [smem:[#allocation3]]
    %s94 = smul.u32 %s93, 2654435769
    %v95 = vstv %s94
    %v96 = vxor.u32 %v91, %v95
    %v97 = vxor.u32 %v92, %v95
    %v98 = vshrl.u32 %v96, 16
    %v99 = vshrl.u32 %v97, 16
    %v100 = vxor.u32 %v96, %v98
    %v101 = vxor.u32 %v97, %v99
    %v102 = vmul.u32 %v100, 2246822507
    %v103 = vmul.u32 %v101, 2246822507
    %v104 = vshrl.u32 %v102, 13
    %v105 = vshrl.u32 %v103, 13
    %v106 = vxor.u32 %v102, %v104
    %v107 = vxor.u32 %v103, %v105
    %v108 = vmul.u32 %v106, 3266489909
    %v109 = vmul.u32 %v107, 3266489909
    %v110 = vshrl.u32 %v108, 16
    %v111 = vshrl.u32 %v109, 16
    %v112 = vxor.u32 %v108, %v110
    %v113 = vxor.u32 %v109, %v111
    %v114 = vstv %s93
    %v115 = vxor.u32 %v112, %v114
    %v116 = vxor.u32 %v113, %v114
    %v117 = vshrl.u32 %v115, 16
    %v118 = vshrl.u32 %v116, 16
    %v119 = vxor.u32 %v115, %v117
    %v120 = vxor.u32 %v116, %v118
    %v121 = vmul.u32 %v119, 2246822507
    %v122 = vmul.u32 %v120, 2246822507
    %v123 = vshrl.u32 %v121, 13
    %v124 = vshrl.u32 %v122, 13
    %v125 = vxor.u32 %v121, %v123
    %v126 = vxor.u32 %v122, %v124
    %v127 = vmul.u32 %v125, 3266489909
    %v128 = vmul.u32 %v126, 3266489909
    %v129 = vshrl.u32 %v127, 16
    %v130 = vshrl.u32 %v128, 16
    %v131 = vxor.u32 %v127, %v129
    %v132 = vxor.u32 %v128, %v130
    %v133 = vshrl.u32 %v131, 8
    %v134 = vshrl.u32 %v132, 8
    %v135 = vcvt.s32.f32 %v133
    %v136 = vcvt.s32.f32 %v134
    %v137 = vmul.f32 %v135, 5.9604645e-08
    %v138 = vmul.f32 %v136, 5.9604645e-08
    %vm139 = vcmp.lt.f32.partialorder %v137, %v74
    %vm140 = vcmp.lt.f32.partialorder %v138, %v76
    %v141 = vsel %vm139, 1, 0
    %v142 = vsel %vm140, 1, 0
    %v143 = vcvt.s32.f32 %v141
    %v144 = vcvt.s32.f32 %v142
    %v145 = vsub.f32 1.0, %v143
    %v146 = vsub.f32 1.0, %v144
    %v147 = vmul.f32 %v59, %v145
    %v148 = vmul.f32 %v60, %v146
    %149 = vst [vmem:[#allocation10] sm:$0xff] %v147
    %150 = vst [vmem:[#allocation10 + $0x8] sm:$0xff] %v148
    %v151 = vmul.f32 %v53, 0.9
    %v152 = vmul.f32 %v54, 0.9
    %v153 = vmul.f32 %v143, 0.05
    %v154 = vmul.f32 %v144, 0.05
    %v155 = vadd.f32 %v151, %v153
    %v156 = vadd.f32 %v152, %v154
    %157 = vst [vmem:[#allocation12] sm:$0xff] %v155
    %158 = vst [vmem:[#allocation12 + $0x8] sm:$0xff] %v156
    %159 = vst [vmem:[#allocation9] sm:$0xff] %v143
    %160 = vst [vmem:[#allocation9 + $0x8] sm:$0xff] %v144
    // Predicated region
    $region22: #{tpu_custom_call.1} parent=1 // pred_check
      _
    $region23: #{tpu_custom_call.1} parent=1 // pred_check_branch
      %162 = sbr.rel (0) target = $region25
    $region24: #{tpu_custom_call.1} parent=1 // pred_region
      %s164 = ssub.s32 256, 256
      %165 = vsyncadd [#allocation6], %s164
      %s166 = sshll.u32 [#allocation9], 4
      %s167 = int_to_ptr.vmem [resolvable:$true] %s166
      %172 = dma.vmem_to_hbm [thread:$0]  %s167, 256, %s4, [#allocation6], 128, 128, 8
    $region25: #{tpu_custom_call.1} parent=1 // pred_fallthru
      _
    // Predicated region
    $region26: #{tpu_custom_call.1} parent=1 // pred_check
      _
    $region27: #{tpu_custom_call.1} parent=1 // pred_check_branch
      %174 = sbr.rel (0) target = $region29
    $region28: #{tpu_custom_call.1} parent=1 // pred_region
      %s176 = ssub.s32 256, 256
      %177 = vsyncadd [#allocation11], %s176
      %s178 = sshll.u32 [#allocation10], 4
      %s179 = int_to_ptr.vmem [resolvable:$true] %s178
      %184 = dma.vmem_to_hbm [thread:$0]  %s179, 256, %s5, [#allocation11], 128, 128, 8
    $region29: #{tpu_custom_call.1} parent=1 // pred_fallthru
      _
    // Predicated region
    $region30: #{tpu_custom_call.1} parent=1 // pred_check
      _
    $region31: #{tpu_custom_call.1} parent=1 // pred_check_branch
      %186 = sbr.rel (0) target = $region33
    $region32: #{tpu_custom_call.1} parent=1 // pred_region
      %s188 = ssub.s32 256, 256
      %189 = vsyncadd [#allocation11], %s188
      %s190 = sshll.u32 [#allocation12], 4
      %s191 = int_to_ptr.vmem [resolvable:$true] %s190
      %196 = dma.vmem_to_hbm [thread:$0]  %s191, 256, %s6, [#allocation11], 128, 128, 8
    $region33: #{tpu_custom_call.1} parent=1 // pred_fallthru
      _
    // Predicated region
    $region34: #{tpu_custom_call.1} parent=1 // pred_check
      _
    $region35: #{tpu_custom_call.1} parent=1 // pred_check_branch
      %198 = sbr.rel (0) target = $region37
    $region36: #{tpu_custom_call.1} parent=1 // pred_region
      %199 = dma.done [#allocation6], 256
    $region37: #{tpu_custom_call.1} parent=1 // pred_fallthru
      _
    // Predicated region
    $region38: #{tpu_custom_call.1} parent=1 // pred_check
      _
    $region39: #{tpu_custom_call.1} parent=1 // pred_check_branch
      %201 = sbr.rel (0) target = $region41
    $region40: #{tpu_custom_call.1} parent=1 // pred_region
      %202 = dma.done [#allocation11], 256
    $region41: #{tpu_custom_call.1} parent=1 // pred_fallthru
      _
    // Predicated region
    $region42: #{tpu_custom_call.1} parent=1 // pred_check
      _
    $region43: #{tpu_custom_call.1} parent=1 // pred_check_branch
      %204 = sbr.rel (0) target = $region45
    $region44: #{tpu_custom_call.1} parent=1 // pred_region
      %205 = dma.done [#allocation11], 256
    $region45: #{tpu_custom_call.1} parent=1 // pred_fallthru
      _
    %206 = vsyncpa [#allocation5], 1
    %207 = vsyncpa [#allocation8], 1
    %208 = vsyncpa [#allocation6], 1
    %209 = vsyncpa [#allocation11], 1

</llo_original>
